<compile_context>
chip_gen: v5e
topology: v5e:2x2
jax: 0.10.0
libtpu: 0.0.40
codegen_flags: <defaults>
</compile_context>

<pallas_src>
import functools

import jax
import jax.numpy as jnp
from jax.experimental import pallas as pl
from jax.experimental.pallas import tpu as pltpu

LANES = 128
SUBLANES = 8
VREG_ELEMS = SUBLANES * LANES            # 1024 elements = one f32 vreg
MAX_BLOCK_ROWS = 4096                    # (4096, 128) f32 tile = 2 MiB per input
VMEM_LIMIT_BYTES = 32 * 1024 * 1024      # safe on v5e/v6e/v7x, above v5e's 16 MiB default


def _nll_elementwise(pred, uncert, teacher, *, loss_kind, rel_uncert):
    """f32 elementwise NLL; used both in-kernel and for the tiny wrapper tail."""
    pred = pred.astype(jnp.float32)
    uncert = uncert.astype(jnp.float32)
    teacher = teacher.astype(jnp.float32)
    if rel_uncert:                       # log_pred_uncert = log(u), pred_uncert = u
        log_pu = jnp.log(uncert)
        inv_pu = 1.0 / uncert            # exact; approx reciprocal not needed for accuracy
    else:                                # log_pred_uncert = u, pred_uncert = exp(u)
        log_pu = uncert
        inv_pu = jnp.exp(-uncert)        # == 1 / exp(u) without a divide
    diff = pred - teacher
    if loss_kind == "laplace":
        return jnp.abs(diff) * inv_pu + log_pu
    elif loss_kind == "normal":
        z = diff * inv_pu
        return 0.5 * z * z + log_pu
    raise NotImplementedError(loss_kind)


def _self_loss_kernel(p_ref, u_ref, t_ref, out_ref, acc_ref, *,
                      loss_kind, rel_uncert, total_blocks, blocks_per_shard,
                      valid_rows_last, block_rows):
    j = pl.program_id(1)                                  # block index within shard
    b = pl.program_id(0) * blocks_per_shard + j           # global block index

    @pl.when(j == 0)
    def _zero():
        acc_ref[...] = jnp.zeros_like(acc_ref)

    def block_loss():
        return _nll_elementwise(p_ref[...], u_ref[...], t_ref[...],
                                loss_kind=loss_kind, rel_uncert=rel_uncert)

    def accumulate(loss):
        # Vreg-aligned partial reduce: rows are grouped in 8s, so this is pure
        # VPU vreg adds into a single (8, 128) accumulator (no XLU, no big RMW).
        acc_ref[...] += loss.reshape(-1, SUBLANES, LANES).sum(axis=0)

    if valid_rows_last == block_rows:
        # Every block is full: single mask-free hot path.  (b >= total_blocks
        # only happens on the clamped filler steps of an uneven shard split.)
        @pl.when(b < total_blocks)
        def _full():
            accumulate(block_loss())
    else:
        @pl.when(b < total_blocks - 1)
        def _full():
            accumulate(block_loss())

        @pl.when(b == total_blocks - 1)
        def _last_partial():
            loss = block_loss()
            row_ids = jax.lax.broadcasted_iota(jnp.int32, loss.shape, 0)
            # Select (not multiply): out-of-bounds rows of the partial trailing
            # block hold unspecified data (possibly inf/NaN) and must not leak.
            accumulate(jnp.where(row_ids < valid_rows_last, loss, 0.0))

    @pl.when(j == blocks_per_shard - 1)
    def _finalize():
        out_ref[...] = acc_ref[...].reshape(1, SUBLANES, LANES)


class SelfLossPallas:
    """Pallas forward for SelfLoss (mean NLL), mirroring the PyTorch __init__."""

    def __init__(self, stud_dist, stud_uncert_as_a_fraction_of_depth, kldiv,
                 teacher_dist, max_block_rows=MAX_BLOCK_ROWS):
        # The kldiv branch in the PyTorch module is always overridden by the
        # following if/elif/else; only its error behaviour is reproduced.
        if kldiv:
            if not ((stud_dist == "normal" and teacher_dist == "normal")
                    or (stud_dist == "laplace" and teacher_dist == "laplace")):
                raise NotImplementedError
        if stud_dist == "laplace":
            self.loss_kind = "laplace"
        elif stud_dist == "normal":
            self.loss_kind = "normal"
        else:
            raise NotImplementedError
        self.rel_uncert = bool(stud_uncert_as_a_fraction_of_depth)
        self.max_block_rows = int(max_block_rows)
        assert self.max_block_rows % SUBLANES == 0

    def __call__(self, pred, pred_uncert, teacher_depth, teacher_uncert):
        del teacher_uncert                      # unused by the NLL losses -> never DMA'd
        orig_dtype = pred.dtype
        n = pred.size
        assert n > 0

        # Free reshapes only (flatten of a contiguous array is a bitcast).
        p_flat = pred.reshape(-1)
        u_flat = pred_uncert.reshape(-1)
        t_flat = teacher_depth.reshape(-1)

        n_main = (n // VREG_ELEMS) * VREG_ELEMS   # whole (8,128) vregs for the kernel
        rows = n_main // LANES                    # always a multiple of 8
        pieces = []

        if rows > 0:
            block_rows = min(self.max_block_rows, rows)
            total_blocks = pl.cdiv(rows, block_rows)
            valid_rows_last = rows - (total_blocks - 1) * block_rows

            # 2 TensorCores on v7x / megacore parts, 1 on v5e/v6e.
            num_cores = int(getattr(jax.devices()[0], "num_cores", 1) or 1)
            num_shards = max(1, min(num_cores, total_blocks))
            blocks_per_shard = pl.cdiv(total_blocks, num_shards)

            kernel = functools.partial(
                _self_loss_kernel,
                loss_kind=self.loss_kind,
                rel_uncert=self.rel_uncert,
                total_blocks=total_blocks,
                blocks_per_shard=blocks_per_shard,
                valid_rows_last=valid_rows_last,
                block_rows=block_rows,
            )

            def in_map(s, j):
                # Clamp so uneven shard splits still index a valid block; the
                # kernel skips accumulation for those filler steps.
                return (jnp.minimum(s * blocks_per_shard + j, total_blocks - 1), 0)

            blk = pl.BlockSpec((block_rows, LANES), in_map)

            bytes_in = rows * LANES * (jnp.dtype(pred.dtype).itemsize
                                       + jnp.dtype(pred_uncert.dtype).itemsize
                                       + jnp.dtype(teacher_depth.dtype).itemsize)
            cost = pl.CostEstimate(
                flops=6 * rows * LANES,
                transcendentals=rows * LANES,
                bytes_accessed=bytes_in + num_shards * SUBLANES * LANES * 4)

            # When n_main == n the slice below is full-extent (elided by XLA) and
            # the reshape is free: fully zero-copy staging.
            # TODO(synk): for ragged n (n_main < n) this prefix slice materializes
            # one staging copy of the main region; a fully zero-copy ragged path
            # would need memory_space=pl.ANY + manual 1-D DMA blocks, which was
            # not adopted here for lowering robustness.
            p2 = p_flat[:n_main].reshape(rows, LANES)
            u2 = u_flat[:n_main].reshape(rows, LANES)
            t2 = t_flat[:n_main].reshape(rows, LANES)

            partials = pl.pallas_call(
                kernel,
                out_shape=jax.ShapeDtypeStruct((num_shards, SUBLANES, LANES), jnp.float32),
                grid_spec=pltpu.PrefetchScalarGridSpec(
                    num_scalar_prefetch=0,
                    grid=(num_shards, blocks_per_shard),
                    in_specs=[blk, blk, blk],
                    out_specs=pl.BlockSpec((1, SUBLANES, LANES), lambda s, j: (s, 0, 0)),
                    scratch_shapes=[pltpu.VMEM((SUBLANES, LANES), jnp.float32)],
                ),
                compiler_params=pltpu.CompilerParams(
                    dimension_semantics=("parallel", "arbitrary"),
                    vmem_limit_bytes=VMEM_LIMIT_BYTES),
                cost_estimate=cost,
            )(p2, u2, t2)
            pieces.append(jnp.sum(partials, dtype=jnp.float32))

        if n_main < n:
            # <1024-element tail: a few plain-jnp ops on tiny slices, negligible.
            tail = _nll_elementwise(p_flat[n_main:], u_flat[n_main:], t_flat[n_main:],
                                    loss_kind=self.loss_kind, rel_uncert=self.rel_uncert)
            pieces.append(jnp.sum(tail, dtype=jnp.float32))

        total = sum(pieces) / n
        return total.astype(orig_dtype)


def _reference(loss_kind, rel_uncert, pred, pred_uncert, teacher_depth, teacher_uncert):
    del teacher_uncert
    if rel_uncert:
        log_pu, pu = jnp.log(pred_uncert), pred_uncert
    else:
        log_pu, pu = pred_uncert, jnp.exp(pred_uncert)
    if loss_kind == "laplace":
        loss = jnp.abs(pred - teacher_depth) / pu + log_pu
    else:
        loss = 0.5 * ((pred - teacher_depth) / pu) ** 2 + log_pu
    return loss.mean()


if __name__ == "__main__":
    key = jax.random.PRNGKey(0)
    k1, k2, k3, k4 = jax.random.split(key, 4)

    # Primary: NCHW conv-style inputs (n = 2048 -> single-block kernel path).
    B, C, H, W = 2, 4, 16, 16
    pred = jax.random.normal(k1, (B, C, H, W), jnp.float32)
    pred_uncert = jax.random.normal(k2, (B, C, H, W), jnp.float32) * 0.5
    teacher_depth = jax.random.normal(k3, (B, C, H, W), jnp.float32)
    teacher_uncert = jax.random.uniform(k4, (B, C, H, W), jnp.float32) + 0.5

    laplace_abs = SelfLossPallas(stud_dist="laplace",
                                 stud_uncert_as_a_fraction_of_depth=False,
                                 kldiv=False, teacher_dist="laplace")
    out = jax.block_until_ready(laplace_abs(pred, pred_uncert, teacher_depth, teacher_uncert))
    ref = _reference("laplace", False, pred, pred_uncert, teacher_depth, teacher_uncert)
    assert jnp.allclose(out, ref, rtol=1e-5, atol=1e-5), (out, ref)

    # normal NLL + relative (positive) uncertainty.
    normal_rel = SelfLossPallas("normal", True, False, "normal")
    pu_pos = jnp.abs(pred_uncert) + 0.1
    out2 = jax.block_until_ready(normal_rel(pred, pu_pos, teacher_depth, teacher_uncert))
    ref2 = _reference("normal", True, pred, pu_pos, teacher_depth, teacher_uncert)
    assert jnp.allclose(out2, ref2, rtol=1e-5, atol=1e-5), (out2, ref2)

    # Ragged element count (n = 1938): kernel handles the first 1024 elements,
    # the 914-element tail is reduced by the wrapper and added to the partials.
    shp = (2, 3, 17, 19)
    pr = jax.random.normal(k1, shp, jnp.float32)
    pu = jnp.abs(jax.random.normal(k2, shp, jnp.float32)) + 0.2
    td = jax.random.normal(k3, shp, jnp.float32)
    tu = jax.random.uniform(k4, shp, jnp.float32) + 0.5
    out3 = jax.block_until_ready(normal_rel(pr, pu, td, tu))
    ref3 = _reference("normal", True, pr, pu, td, tu)
    assert jnp.allclose(out3, ref3, rtol=1e-5, atol=1e-5), (out3, ref3)

    # Multi-block grid + partial trailing block (row mask) + wrapper tail,
    # using a small max_block_rows so the test stays tiny (n = 34320).
    shp = (2, 4, 66, 65)
    laplace_small_blocks = SelfLossPallas("laplace", False, False, "laplace",
                                          max_block_rows=64)
    pr = jax.random.normal(k1, shp, jnp.float32)
    pu = jax.random.normal(k2, shp, jnp.float32) * 0.5
    td = jax.random.normal(k3, shp, jnp.float32)
    tu = jax.random.uniform(k4, shp, jnp.float32) + 0.5
    out4 = jax.block_until_ready(laplace_small_blocks(pr, pu, td, tu))
    ref4 = _reference("laplace", False, pr, pu, td, tu)
    assert jnp.allclose(out4, ref4, rtol=1e-4, atol=1e-4), (out4, ref4)

    print("KERNEL_OK")
</pallas_src>

<mosaic_0001>
module attributes {stable_mosaic.version = 11 : i64} {
  func.func @_self_loss_kernel(%arg0: i32, %arg1: i32, %arg2: memref<16x128xf32, #tpu.memory_space<vmem>>, %arg3: memref<16x128xf32, #tpu.memory_space<vmem>>, %arg4: memref<16x128xf32, #tpu.memory_space<vmem>>, %arg5: memref<1x8x128xf32, #tpu.memory_space<vmem>>, %arg6: memref<8x128xf32, #tpu.memory_space<vmem>>) attributes {dimension_semantics = [#tpu.dimension_semantics<parallel>, #tpu.dimension_semantics<arbitrary>], iteration_bounds = array<i64: 1, 1>, scalar_prefetch = 0 : i64, scratch_operands = 1 : i64, tpu.core_type = #tpu.core_type<tc>, window_params = [{transform_indices = @transform_0, window_bounds = array<i64: 16, 128>}, {transform_indices = @transform_1, window_bounds = array<i64: 16, 128>}, {transform_indices = @transform_2, window_bounds = array<i64: 16, 128>}, {transform_indices = @transform_3, window_bounds = array<i64: 1, 8, 128>}]} {
    %c1_i32 = arith.constant 1 : i32
    %0 = arith.muli %arg0, %c1_i32 : i32
    %1 = arith.addi %0, %arg1 : i32
    %c0_i32 = arith.constant 0 : i32
    %2 = arith.cmpi eq, %arg1, %c0_i32 : i32
    %3 = arith.extui %2 : i1 to i32
    %c0_i32_0 = arith.constant 0 : i32
    %4 = arith.cmpi ne, %3, %c0_i32_0 : i32
    scf.if %4 {
      %cst = arith.constant 0.000000e+00 : f32
      %11 = vector.broadcast %cst : f32 to vector<8x128xf32>
      %c0 = arith.constant 0 : index
      %c0_5 = arith.constant 0 : index
      %12 = vector.load %arg6[%c0, %c0_5] : memref<8x128xf32, #tpu.memory_space<vmem>>, vector<8x128xf32>
      tpu.vector_store %arg6[%c0, %c0_5], %11 {strides = array<i32>} : memref<8x128xf32, #tpu.memory_space<vmem>>, vector<8x128xf32>,
    } else {
    }
    %c1_i32_1 = arith.constant 1 : i32
    %5 = arith.cmpi slt, %1, %c1_i32_1 : i32
    %6 = arith.extui %5 : i1 to i32
    %c0_i32_2 = arith.constant 0 : i32
    %7 = arith.cmpi ne, %6, %c0_i32_2 : i32
    scf.if %7 {
      %c0 = arith.constant 0 : index
      %c0_5 = arith.constant 0 : index
      %11 = vector.load %arg2[%c0, %c0_5] : memref<16x128xf32, #tpu.memory_space<vmem>>, vector<16x128xf32>
      %c0_6 = arith.constant 0 : index
      %c0_7 = arith.constant 0 : index
      %12 = vector.load %arg3[%c0_6, %c0_7] : memref<16x128xf32, #tpu.memory_space<vmem>>, vector<16x128xf32>
      %c0_8 = arith.constant 0 : index
      %c0_9 = arith.constant 0 : index
      %13 = vector.load %arg4[%c0_8, %c0_9] : memref<16x128xf32, #tpu.memory_space<vmem>>, vector<16x128xf32>
      %cst = arith.constant 0.000000e+00 : f32
      %14 = vector.broadcast %cst : f32 to vector<16x128xf32>
      %15 = arith.subf %14, %12 : vector<16x128xf32>
      %16 = math.exp %15 : vector<16x128xf32>
      %17 = arith.subf %11, %13 : vector<16x128xf32>
      %18 = math.absf %17 : vector<16x128xf32>
      %19 = arith.mulf %18, %16 : vector<16x128xf32>
      %20 = arith.addf %19, %12 : vector<16x128xf32>
      %c0_10 = arith.constant 0 : index
      %c0_11 = arith.constant 0 : index
      %21 = vector.load %arg6[%c0_10, %c0_11] : memref<8x128xf32, #tpu.memory_space<vmem>>, vector<8x128xf32>
      %22 = vector.shape_cast %20 : vector<16x128xf32> to vector<2x8x128xf32>
      %cst_12 = arith.constant dense<0.000000e+00> : vector<8x128xf32>
      %23 = vector.multi_reduction <add>, %22, %cst_12 [0] : vector<2x8x128xf32> to vector<8x128xf32>
      %24 = arith.addf %21, %23 : vector<8x128xf32>
      %c0_13 = arith.constant 0 : index
      %c0_14 = arith.constant 0 : index
      %25 = vector.load %arg6[%c0_13, %c0_14] : memref<8x128xf32, #tpu.memory_space<vmem>>, vector<8x128xf32>
      tpu.vector_store %arg6[%c0_13, %c0_14], %24 {strides = array<i32>} : memref<8x128xf32, #tpu.memory_space<vmem>>, vector<8x128xf32>,
    } else {
    }
    %c0_i32_3 = arith.constant 0 : i32
    %8 = arith.cmpi eq, %arg1, %c0_i32_3 : i32
    %9 = arith.extui %8 : i1 to i32
    %c0_i32_4 = arith.constant 0 : i32
    %10 = arith.cmpi ne, %9, %c0_i32_4 : i32
    scf.if %10 {
      %c0 = arith.constant 0 : index
      %c0_5 = arith.constant 0 : index
      %11 = vector.load %arg6[%c0, %c0_5] : memref<8x128xf32, #tpu.memory_space<vmem>>, vector<8x128xf32>
      %12 = vector.shape_cast %11 : vector<8x128xf32> to vector<1x8x128xf32>
      %c0_6 = arith.constant 0 : index
      %c0_7 = arith.constant 0 : index
      %c0_8 = arith.constant 0 : index
      %13 = vector.load %arg5[%c0_6, %c0_7, %c0_8] : memref<1x8x128xf32, #tpu.memory_space<vmem>>, vector<1x8x128xf32>
      tpu.vector_store %arg5[%c0_6, %c0_7, %c0_8], %12 {strides = array<i32>} : memref<1x8x128xf32, #tpu.memory_space<vmem>>, vector<1x8x128xf32>,
    } else {
    }
    return
  }
  func.func @transform_0(%arg0: i32, %arg1: i32) -> (i32, i32) {
    %c1_i32 = arith.constant 1 : i32
    %0 = arith.muli %arg0, %c1_i32 : i32
    %1 = arith.addi %0, %arg1 : i32
    %c0_i32 = arith.constant 0 : i32
    %2 = arith.minsi %1, %c0_i32 : i32
    %c0_i32_0 = arith.constant 0 : i32
    %c0_i32_1 = arith.constant 0 : i32
    return %2, %c0_i32_0 : i32, i32
  }
  func.func @transform_1(%arg0: i32, %arg1: i32) -> (i32, i32) {
    %c1_i32 = arith.constant 1 : i32
    %0 = arith.muli %arg0, %c1_i32 : i32
    %1 = arith.addi %0, %arg1 : i32
    %c0_i32 = arith.constant 0 : i32
    %2 = arith.minsi %1, %c0_i32 : i32
    %c0_i32_0 = arith.constant 0 : i32
    %c0_i32_1 = arith.constant 0 : i32
    return %2, %c0_i32_0 : i32, i32
  }
  func.func @transform_2(%arg0: i32, %arg1: i32) -> (i32, i32) {
    %c1_i32 = arith.constant 1 : i32
    %0 = arith.muli %arg0, %c1_i32 : i32
    %1 = arith.addi %0, %arg1 : i32
    %c0_i32 = arith.constant 0 : i32
    %2 = arith.minsi %1, %c0_i32 : i32
    %c0_i32_0 = arith.constant 0 : i32
    %c0_i32_1 = arith.constant 0 : i32
    return %2, %c0_i32_0 : i32, i32
  }
  func.func @transform_3(%arg0: i32, %arg1: i32) -> (i32, i32, i32) {
    %c0_i32 = arith.constant 0 : i32
    %c0_i32_0 = arith.constant 0 : i32
    %c0_i32_1 = arith.constant 0 : i32
    return %arg0, %c0_i32, %c0_i32_0 : i32, i32, i32
  }
}

</mosaic_0001>

<llo_original>
// kernel: tpu_custom_call.1
$region0: #{tpu_custom_call.1}
  #allocation0 [shape = 'u32[]', space=smem, size = 0x4, offset = 0x4, fixed_abs, tag = 'smem constant byte address 0x4 - core index']
  #allocation1 [shape = 'u32[72,128]{1,0:T(1,128)}', space=vmem, size = 0x9000, scoped, tag = 'internal scratch']
  #allocation2 [shape = 'f32[8,128]{1,0:T(8,128)}', space=vmem, size = 0x1000, scoped, tag = 'scratch operand']
  %s0 = inlined_call_operand.hbm [shape: f32[16,128], index: 0, kind: input, shape index: {}]
  %s1 = inlined_call_operand.hbm [shape: f32[16,128], index: 1, kind: input, shape index: {}]
  %s2 = inlined_call_operand.hbm [shape: f32[16,128], index: 2, kind: input, shape index: {}]
  %s3 = inlined_call_operand.hbm [shape: f32[1,8,128], index: 3, kind: output, shape index: {}]
  %s4 = sld [smem:[#allocation0]]
  $region46: #{tpu_custom_call.1} parent=0
    _
  %s6 = ssub.s32 1, %s4
  %s7 = scalar_select 0, %s6, %s4
  $region1: #{tpu_custom_call.1} parent=0
    #allocation3 [shape = 'u8[8192]{0}', space=vmem, size = 0x2000, scoped, tag = 'input window, operand 0, single buffered']
    #allocation4 [shape = 's32[1]{0}', space=sflag, size = 0x4, scoped, tag = 'scoped memory for tpu_custom_call.1']
    #allocation5 [shape = 's32[1]{0}', space=sflag, size = 0x4, scoped, tag = 'scoped memory for tpu_custom_call.1']
    #allocation6 [shape = 'u8[8192]{0}', space=vmem, size = 0x2000, scoped, tag = 'input window, operand 1, single buffered']
    #allocation7 [shape = 's32[1]{0}', space=sflag, size = 0x4, scoped, tag = 'scoped memory for tpu_custom_call.1']
    #allocation8 [shape = 'u8[8192]{0}', space=vmem, size = 0x2000, scoped, tag = 'input window, operand 2, single buffered']
    #allocation9 [shape = 'u8[4096]{0}', space=vmem, size = 0x1000, scoped, tag = 'output window, operand 0, single buffered']
    %8 = vsyncpa [#allocation4], 0
    %9 = vsyncpa [#allocation7], 0
    %10 = vsyncpa [#allocation5], 0
    // Predicated region
    $region2: #{tpu_custom_call.1} parent=1 // pred_check
      _
    $region3: #{tpu_custom_call.1} parent=1 // pred_check_branch
      %12 = sbr.rel (0) target = $region5
    $region4: #{tpu_custom_call.1} parent=1 // pred_region
      %s13 = sadd.s32 0, 0
      %p14 = scmp.lt.s32.totalorder %s13, 0
      %s15 = scalar_select %p14, %s13, 0
      %s16 = smul.u32 2, %s15
      %18 = vsyncadd [#allocation4], 0
      %s19 = smul.addr %s16, 8
      %s20 = scalar_lea.hbm %s0, %s19
      %s21 = sshll.u32 %s20, 4
      %s22 = int_to_ptr.hbm [resolvable:$true] %s21
      %s23 = sshll.u32 [#allocation3], 4
      %s24 = int_to_ptr.vmem [resolvable:$true] %s23
      %29 = dma.hbm_to_vmem [thread:$0]  %s22, 256, %s24, [#allocation4], 128, 128, 8
    $region5: #{tpu_custom_call.1} parent=1 // pred_fallthru
      _
    // Predicated region
    $region6: #{tpu_custom_call.1} parent=1 // pred_check
      _
    $region7: #{tpu_custom_call.1} parent=1 // pred_check_branch
      %31 = sbr.rel (0) target = $region9
    $region8: #{tpu_custom_call.1} parent=1 // pred_region
      %s32 = sadd.s32 0, 0
      %p33 = scmp.lt.s32.totalorder %s32, 0
      %s34 = scalar_select %p33, %s32, 0
      %s35 = smul.u32 2, %s34
      %37 = vsyncadd [#allocation7], 0
      %s38 = smul.addr %s35, 8
      %s39 = scalar_lea.hbm %s1, %s38
      %s40 = sshll.u32 %s39, 4
      %s41 = int_to_ptr.hbm [resolvable:$true] %s40
      %s42 = sshll.u32 [#allocation6], 4
      %s43 = int_to_ptr.vmem [resolvable:$true] %s42
      %48 = dma.hbm_to_vmem [thread:$0]  %s41, 256, %s43, [#allocation7], 128, 128, 8
    $region9: #{tpu_custom_call.1} parent=1 // pred_fallthru
      _
    // Predicated region
    $region10: #{tpu_custom_call.1} parent=1 // pred_check
      _
    $region11: #{tpu_custom_call.1} parent=1 // pred_check_branch
      %50 = sbr.rel (0) target = $region13
    $region12: #{tpu_custom_call.1} parent=1 // pred_region
      %s51 = sadd.s32 0, 0
      %p52 = scmp.lt.s32.totalorder %s51, 0
      %s53 = scalar_select %p52, %s51, 0
      %s54 = smul.u32 2, %s53
      %56 = vsyncadd [#allocation7], 0
      %s57 = smul.addr %s54, 8
      %s58 = scalar_lea.hbm %s2, %s57
      %s59 = sshll.u32 %s58, 4
      %s60 = int_to_ptr.hbm [resolvable:$true] %s59
      %s61 = sshll.u32 [#allocation8], 4
      %s62 = int_to_ptr.vmem [resolvable:$true] %s61
      %67 = dma.hbm_to_vmem [thread:$0]  %s60, 256, %s62, [#allocation7], 128, 128, 8
    $region13: #{tpu_custom_call.1} parent=1 // pred_fallthru
      _
    // Predicated region
    $region14: #{tpu_custom_call.1} parent=1 // pred_check
      _
    $region15: #{tpu_custom_call.1} parent=1 // pred_check_branch
      %69 = sbr.rel (0) target = $region17
    $region16: #{tpu_custom_call.1} parent=1 // pred_region
      %71 = dma.done [#allocation4], 256
    $region17: #{tpu_custom_call.1} parent=1 // pred_fallthru
      _
    // Predicated region
    $region18: #{tpu_custom_call.1} parent=1 // pred_check
      _
    $region19: #{tpu_custom_call.1} parent=1 // pred_check_branch
      %73 = sbr.rel (0) target = $region21
    $region20: #{tpu_custom_call.1} parent=1 // pred_region
      %75 = dma.done [#allocation7], 256
    $region21: #{tpu_custom_call.1} parent=1 // pred_fallthru
      _
    // Predicated region
    $region22: #{tpu_custom_call.1} parent=1 // pred_check
      _
    $region23: #{tpu_custom_call.1} parent=1 // pred_check_branch
      %77 = sbr.rel (0) target = $region25
    $region24: #{tpu_custom_call.1} parent=1 // pred_region
      %79 = dma.done [#allocation7], 256
    $region25: #{tpu_custom_call.1} parent=1 // pred_fallthru
      _
    %s80 = sadd.s32 0, 0
    %p81 = scmp.lt.s32.totalorder %s80, 0
    %s82 = scalar_select %p81, %s80, 0
    %s83 = smul.u32 2, %s82
    %s84 = sadd.s32 0, 0
    %p85 = scmp.lt.s32.totalorder %s84, 0
    %s86 = scalar_select %p85, %s84, 0
    %s87 = smul.u32 2, %s86
    %s88 = sadd.s32 0, 0
    %p89 = scmp.lt.s32.totalorder %s88, 0
    %s90 = scalar_select %p89, %s88, 0
    %s91 = smul.u32 2, %s90
    %s92 = sadd.s32 0, 0
    %p93 = scmp.eq.s32.totalorder 0, 0
    // Predicated region
    $region26: #{tpu_custom_call.1} parent=1 // pred_check
      %p94 = pneg %p93
    $region27: #{tpu_custom_call.1} parent=1 // pred_check_branch
      %96 = sbr.rel (%p94) target = $region29
    $region28: #{tpu_custom_call.1} parent=1 // pred_region
      %97 = vst [vmem:[#allocation2] sm:$0xff] 0.0
    $region29: #{tpu_custom_call.1} parent=1 // pred_fallthru
      _
    %p98 = scmp.lt.s32.totalorder %s92, 1
    // Predicated region
    $region30: #{tpu_custom_call.1} parent=1 // pred_check
      %p99 = pneg %p98
    $region31: #{tpu_custom_call.1} parent=1 // pred_check_branch
      %101 = sbr.rel (%p99) target = $region33
    $region32: #{tpu_custom_call.1} parent=1 // pred_region
      %v102 = vld [vmem:[#allocation3] sm:$0xff]
      %v103 = vld [vmem:[#allocation3 + $0x8] sm:$0xff]
      %v104 = vld [vmem:[#allocation6] sm:$0xff]
      %v105 = vld [vmem:[#allocation6 + $0x8] sm:$0xff]
      %v106 = vld [vmem:[#allocation8] sm:$0xff]
      %v107 = vld [vmem:[#allocation8 + $0x8] sm:$0xff]
      %v108 = vsub.f32 0.0, %v104
      %v109 = vsub.f32 0.0, %v105
      %v110 = vmul.f32 %v108, 1.442695
      %v111 = vpow.pop %v110
      %v112 = vmul.f32 %v109, 1.442695
      %v113 = vpow.pop %v112
      %v114 = vsub.f32 %v102, %v106
      %v115 = vsub.f32 %v103, %v107
      %v116 = vand.u32 2147483647, %v114
      %v117 = vand.u32 2147483647, %v115
      %v118 = vmul.f32 %v116, %v111
      %v119 = vmul.f32 %v117, %v113
      %v120 = vadd.f32 %v118, %v104
      %v121 = vadd.f32 %v119, %v105
      %v122 = vld [vmem:[#allocation2] sm:$0xff]
      %v123 = vadd.f32 %v120, %v121
      %v124 = vadd.f32 %v122, %v123
      %125 = vst [vmem:[#allocation2] sm:$0xff] %v124
    $region33: #{tpu_custom_call.1} parent=1 // pred_fallthru
      _
    // Predicated region
    $region34: #{tpu_custom_call.1} parent=1 // pred_check
      %p126 = pneg %p93
    $region35: #{tpu_custom_call.1} parent=1 // pred_check_branch
      %128 = sbr.rel (%p126) target = $region37
    $region36: #{tpu_custom_call.1} parent=1 // pred_region
      %v129 = vld [vmem:[#allocation2] sm:$0xff]
      %130 = vst [vmem:[#allocation9] sm:$0xff] %v129
    $region37: #{tpu_custom_call.1} parent=1 // pred_fallthru
      _
    // Predicated region
    $region38: #{tpu_custom_call.1} parent=1 // pred_check
      _
    $region39: #{tpu_custom_call.1} parent=1 // pred_check_branch
      %132 = sbr.rel (0) target = $region41
    $region40: #{tpu_custom_call.1} parent=1 // pred_region
      %134 = vsyncadd [#allocation5], 0
      %s136 = sshll.u32 [#allocation9], 4
      %s137 = int_to_ptr.vmem [resolvable:$true] %s136
      %s138 = sshll.u32 %s3, 4
      %s139 = int_to_ptr.hbm [resolvable:$true] %s138
      %141 = dma.vmem_to_hbm [thread:$0]  %s137, 128, %s139, [#allocation5]
    $region41: #{tpu_custom_call.1} parent=1 // pred_fallthru
      _
    // Predicated region
    $region42: #{tpu_custom_call.1} parent=1 // pred_check
      _
    $region43: #{tpu_custom_call.1} parent=1 // pred_check_branch
      %143 = sbr.rel (0) target = $region45
    $region44: #{tpu_custom_call.1} parent=1 // pred_region
      %145 = dma.done [#allocation5], 128
    $region45: #{tpu_custom_call.1} parent=1 // pred_fallthru
      _
    %146 = vsyncpa [#allocation4], 1
    %147 = vsyncpa [#allocation7], 1
    %148 = vsyncpa [#allocation5], 1

</llo_original>
